<compile_context>
chip_gen: v7x
topology: tpu7x:2x2x1
jax: 0.10.0
libtpu: 0.0.40
codegen_flags: <defaults>
</compile_context>

<pallas_src>
import functools

import jax
import jax.numpy as jnp
from jax.experimental import pallas as pl
from jax.experimental.pallas import tpu as pltpu


def _rcu_kernel(x_ref,               # (1, C, H*W) f32 input slab
                w1_ref, b1_ref,      # folded conv1: (C, 9C) cdtype, (C, 1) f32
                w2_ref, b2_ref,      # folded conv2: (C, 9C) cdtype, (C, 1) f32
                o_ref,               # (1, C, H*W) f32 output slab
                p_ref,               # VMEM scratch (9C, H*W) f32 im2col slab
                *, C, H, W, compute_dtype):
    HW = H * W
    x = x_ref[0]                                          # (C, HW) f32

    # Column index of every flattened spatial position (computed once,
    # reused by both conv stages).
    col = jax.lax.broadcasted_iota(jnp.int32, (1, HW), 1) % W
    left_ok = col >= 1          # source column (x - 1) is in bounds
    right_ok = col <= W - 2     # source column (x + 1) is in bounds

    def conv_bn_relu(a, w_ref, b_ref):
        """a: (C, HW) f32 -> ReLU(fold(BN, conv3x3)(a)) : (C, HW) f32."""
        # Pre-mask the *source* for the horizontal taps: masking source
        # columns before the flat shift is equivalent to masking output
        # columns after it (handles the column wrap between rows).
        srcs = {
            -1: jnp.where(right_ok, a, 0.0),   # used by sx == -1 taps
            0: a,
            1: jnp.where(left_ok, a, 0.0),     # used by sx == +1 taps
        }
        # Build the (9C, HW) im2col slab: tap k = (sy+1)*3 + (sx+1) is the
        # input shifted by s = sy*W + sx along the flat spatial axis, with
        # zeros at the flat boundaries (vertical halo).
        k = 0
        for sy in (-1, 0, 1):
            for sx in (-1, 0, 1):
                s = sy * W + sx
                src = srcs[sx]
                r0 = k * C
                r1 = r0 + C
                if s == 0:
                    p_ref[r0:r1, :] = src
                elif s > 0:
                    p_ref[r0:r1, :HW - s] = src[:, s:]
                    p_ref[r0:r1, HW - s:] = jnp.zeros((C, s), jnp.float32)
                else:
                    m = -s
                    p_ref[r0:r1, :m] = jnp.zeros((C, m), jnp.float32)
                    p_ref[r0:r1, m:] = src[:, :HW - m]
                k += 1
        # One fat MXU matmul: (C, 9C) x (9C, HW), f32 accumulation.
        acc = jnp.dot(w_ref[...], p_ref[...].astype(compute_dtype),
                      preferred_element_type=jnp.float32)
        return jnp.maximum(acc + b_ref[...], 0.0)

    y = conv_bn_relu(x, w1_ref, b1_ref)
    z = conv_bn_relu(y, w2_ref, b2_ref)
    o_ref[0] = z + x                                      # residual (aligned)


def _fold_conv_bn(w_oihw, bias, gamma, beta, mean, var, eps, compute_dtype):
    """Fold Conv2d bias + inference BatchNorm2d into (C, 9C) weight / (C,1) bias."""
    c_out, c_in, kh, kw = w_oihw.shape
    scale = gamma / jnp.sqrt(var + eps)                   # (c_out,)
    shift = beta - mean * scale
    # K index ordering must match the kernel's tap order: (kh, kw, c_in).
    w_mat = jnp.transpose(w_oihw, (0, 2, 3, 1)).reshape(c_out, kh * kw * c_in)
    w_eff = (w_mat * scale[:, None]).astype(compute_dtype)
    b_eff = (bias * scale + shift).reshape(c_out, 1).astype(jnp.float32)
    return w_eff, b_eff


def rcu_pallas(x_nchw, conv1, bn1, conv2, bn2, *, eps=1e-5,
               compute_dtype=jnp.bfloat16):
    """x_nchw: (N, C, H, W) f32.  conv* = (w_oihw, bias), bn* = (gamma, beta, mean, var)."""
    N, C, H, W = x_nchw.shape
    HW = H * W
    w1, b1 = _fold_conv_bn(*conv1, *bn1, eps, compute_dtype)
    w2, b2 = _fold_conv_bn(*conv2, *bn2, eps, compute_dtype)
    x2 = x_nchw.reshape(N, C, HW).astype(jnp.float32)     # no jnp.pad needed

    kernel = functools.partial(_rcu_kernel, C=C, H=H, W=W,
                               compute_dtype=compute_dtype)
    w_spec = pl.BlockSpec((C, 9 * C), lambda n: (0, 0))
    b_spec = pl.BlockSpec((C, 1), lambda n: (0, 0))

    out = pl.pallas_call(
        kernel,
        out_shape=jax.ShapeDtypeStruct((N, C, HW), jnp.float32),
        grid_spec=pltpu.PrefetchScalarGridSpec(
            num_scalar_prefetch=0,
            grid=(N,),
            in_specs=[
                pl.BlockSpec((1, C, HW), lambda n: (n, 0, 0)),
                w_spec, b_spec, w_spec, b_spec,
            ],
            out_specs=pl.BlockSpec((1, C, HW), lambda n: (n, 0, 0)),
            scratch_shapes=[pltpu.VMEM((9 * C, HW), jnp.float32)],
        ),
        compiler_params=pltpu.CompilerParams(
            dimension_semantics=("parallel",)),
    )(x2, w1, b1, w2, b2)
    return out.reshape(N, C, H, W)


def rcu_reference(x, conv1, bn1, conv2, bn2, eps=1e-5):
    """Pure-JAX reference matching the PyTorch module (inference BN)."""
    def cna(x, conv, bn):
        w, b = conv
        g, be, m, v = bn
        y = jax.lax.conv_general_dilated(
            x, w, window_strides=(1, 1), padding="SAME",
            dimension_numbers=("NCHW", "OIHW", "NCHW"))
        y = y + b[None, :, None, None]
        s = g / jnp.sqrt(v + eps)
        y = y * s[None, :, None, None] + (be - m * s)[None, :, None, None]
        return jnp.maximum(y, 0.0)
    return cna(cna(x, conv1, bn1), conv2, bn2) + x


if __name__ == "__main__":
    N, C, H, W = 2, 4, 16, 16
    key = jax.random.PRNGKey(0)
    kx, kw1, kb1, kw2, kb2, kg1, kg2 = jax.random.split(key, 7)

    # PyTorch-layout input and parameters.
    x = jax.random.normal(kx, (N, C, H, W), jnp.float32)
    w1 = jax.random.normal(kw1, (C, C, 3, 3), jnp.float32) * 0.1
    b1 = jax.random.normal(kb1, (C,), jnp.float32) * 0.1
    w2 = jax.random.normal(kw2, (C, C, 3, 3), jnp.float32) * 0.1
    b2 = jax.random.normal(kb2, (C,), jnp.float32) * 0.1

    g1 = 1.0 + 0.1 * jax.random.normal(kg1, (C,), jnp.float32)
    be1 = jnp.linspace(-0.2, 0.2, C, dtype=jnp.float32)
    m1 = jnp.linspace(-0.1, 0.1, C, dtype=jnp.float32)
    v1 = jnp.linspace(0.5, 1.5, C, dtype=jnp.float32)

    g2 = 1.0 + 0.1 * jax.random.normal(kg2, (C,), jnp.float32)
    be2 = jnp.linspace(0.1, -0.1, C, dtype=jnp.float32)
    m2 = jnp.linspace(0.05, -0.05, C, dtype=jnp.float32)
    v2 = jnp.linspace(0.8, 1.2, C, dtype=jnp.float32)

    conv1, bn1 = (w1, b1), (g1, be1, m1, v1)
    conv2, bn2 = (w2, b2), (g2, be2, m2, v2)

    ref = rcu_reference(x, conv1, bn1, conv2, bn2)

    # f32 validation path: proves the conv/BN-fold/ReLU/residual semantics.
    out_f32 = jax.block_until_ready(
        rcu_pallas(x, conv1, bn1, conv2, bn2, compute_dtype=jnp.float32))
    assert out_f32.shape == (N, C, H, W)
    err_f32 = float(jnp.max(jnp.abs(out_f32 - ref)))
    assert err_f32 < 2e-4, f"f32 path max abs err {err_f32}"

    # bf16 fast path (MXU-friendly operands, f32 accumulation): loose check.
    out_bf16 = jax.block_until_ready(
        rcu_pallas(x, conv1, bn1, conv2, bn2, compute_dtype=jnp.bfloat16))
    assert out_bf16.shape == (N, C, H, W)
    err_bf16 = float(jnp.max(jnp.abs(out_bf16 - ref)))
    assert err_bf16 < 1e-1, f"bf16 path max abs err {err_bf16}"

    print("KERNEL_OK")
</pallas_src>

<mosaic_0001>
module attributes {stable_mosaic.version = 11 : i64} {
  func.func @_rcu_kernel(%arg0: i32, %arg1: memref<1x4x256xf32, #tpu.memory_space<vmem>>, %arg2: memref<4x36xf32, #tpu.memory_space<vmem>>, %arg3: memref<4x1xf32, #tpu.memory_space<vmem>>, %arg4: memref<4x36xf32, #tpu.memory_space<vmem>>, %arg5: memref<4x1xf32, #tpu.memory_space<vmem>>, %arg6: memref<1x4x256xf32, #tpu.memory_space<vmem>>, %arg7: memref<36x256xf32, #tpu.memory_space<vmem>>) attributes {dimension_semantics = [#tpu.dimension_semantics<parallel>], iteration_bounds = array<i64: 2>, scalar_prefetch = 0 : i64, scratch_operands = 1 : i64, tpu.core_type = #tpu.core_type<tc>, window_params = [{transform_indices = @transform_0, window_bounds = array<i64: 1, 4, 256>}, {pipeline_mode = #tpu.pipeline_mode<synchronous>, transform_indices = @transform_1, window_bounds = array<i64: 4, 36>}, {pipeline_mode = #tpu.pipeline_mode<synchronous>, transform_indices = @transform_2, window_bounds = array<i64: 4, 1>}, {pipeline_mode = #tpu.pipeline_mode<synchronous>, transform_indices = @transform_3, window_bounds = array<i64: 4, 36>}, {pipeline_mode = #tpu.pipeline_mode<synchronous>, transform_indices = @transform_4, window_bounds = array<i64: 4, 1>}, {transform_indices = @transform_5, window_bounds = array<i64: 1, 4, 256>}]} {
    %c0 = arith.constant 0 : index
    %c0_0 = arith.constant 0 : index
    %c0_1 = arith.constant 0 : index
    %0 = vector.load %arg1[%c0, %c0_0, %c0_1] : memref<1x4x256xf32, #tpu.memory_space<vmem>>, vector<1x4x256xf32>
    %1 = vector.shape_cast %0 : vector<1x4x256xf32> to vector<4x256xf32>
    %2 = tpu.iota {dimensions = array<i32: 1>} : vector<1x256xi32>
    %c16_i32 = arith.constant 16 : i32
    %c0_i32 = arith.constant 0 : i32
    %3 = arith.cmpi eq, %c16_i32, %c0_i32 : i32
    %c1_i32 = arith.constant 1 : i32
    %4 = arith.select %3, %c1_i32, %c16_i32 : i32
    %5 = vector.broadcast %4 : i32 to vector<1x256xi32>
    %6 = arith.remsi %2, %5 : vector<1x256xi32>
    %c0_i32_2 = arith.constant 0 : i32
    %7 = vector.broadcast %c0_i32_2 : i32 to vector<1x256xi32>
    %8 = arith.cmpi ne, %6, %7 : vector<1x256xi32>
    %c0_i32_3 = arith.constant 0 : i32
    %9 = vector.broadcast %c0_i32_3 : i32 to vector<1x256xi32>
    %10 = arith.cmpi slt, %6, %9 : vector<1x256xi32>
    %c0_i32_4 = arith.constant 0 : i32
    %11 = arith.cmpi slt, %4, %c0_i32_4 : i32
    %12 = vector.broadcast %11 : i1 to vector<1x256xi1>
    %13 = vector.broadcast %12 : vector<1x256xi1> to vector<1x256xi1>
    %14 = arith.xori %10, %13 : vector<1x256xi1>
    %15 = arith.andi %14, %8 : vector<1x256xi1>
    %16 = vector.broadcast %4 : i32 to vector<1x256xi32>
    %17 = arith.addi %6, %16 : vector<1x256xi32>
    %18 = arith.select %15, %17, %6 : vector<1x256xi1>, vector<1x256xi32>
    %c1_i32_5 = arith.constant 1 : i32
    %19 = vector.broadcast %c1_i32_5 : i32 to vector<1x256xi32>
    %20 = arith.cmpi sge, %18, %19 : vector<1x256xi32>
    %c14_i32 = arith.constant 14 : i32
    %21 = vector.broadcast %c14_i32 : i32 to vector<1x256xi32>
    %22 = arith.cmpi sle, %18, %21 : vector<1x256xi32>
    %cst = arith.constant 0.000000e+00 : f32
    %23 = vector.shape_cast %22 : vector<1x256xi1> to vector<1x256xi1>
    %24 = vector.broadcast %23 : vector<1x256xi1> to vector<4x256xi1>
    %25 = vector.broadcast %cst : f32 to vector<4x256xf32>
    %26 = arith.select %24, %1, %25 : vector<4x256xi1>, vector<4x256xf32>
    %cst_6 = arith.constant 0.000000e+00 : f32
    %27 = vector.shape_cast %20 : vector<1x256xi1> to vector<1x256xi1>
    %28 = vector.broadcast %27 : vector<1x256xi1> to vector<4x256xi1>
    %29 = vector.broadcast %cst_6 : f32 to vector<4x256xf32>
    %30 = arith.select %28, %1, %29 : vector<4x256xi1>, vector<4x256xf32>
    %cst_7 = arith.constant 0.000000e+00 : f32
    %31 = vector.broadcast %cst_7 : f32 to vector<4x17xf32>
    %c0_8 = arith.constant 0 : index
    %c0_9 = arith.constant 0 : index
    %32 = vector.load %arg7[%c0_8, %c0_9] : memref<36x256xf32, #tpu.memory_space<vmem>>, vector<4x17xf32>
    tpu.vector_store %arg7[%c0_8, %c0_9], %31 {strides = array<i32>} : memref<36x256xf32, #tpu.memory_space<vmem>>, vector<4x17xf32>,
    %33 = vector.extract_strided_slice %26 {offsets = [0, 0], sizes = [4, 239], strides = [1, 1]} : vector<4x256xf32> to vector<4x239xf32>
    %c0_10 = arith.constant 0 : index
    %c17 = arith.constant 17 : index
    %34 = vector.load %arg7[%c0_10, %c17] : memref<36x256xf32, #tpu.memory_space<vmem>>, vector<4x239xf32>
    tpu.vector_store %arg7[%c0_10, %c17], %33 {strides = array<i32>} : memref<36x256xf32, #tpu.memory_space<vmem>>, vector<4x239xf32>,
    %cst_11 = arith.constant 0.000000e+00 : f32
    %35 = vector.broadcast %cst_11 : f32 to vector<4x16xf32>
    %c4 = arith.constant 4 : index
    %c0_12 = arith.constant 0 : index
    %36 = vector.load %arg7[%c4, %c0_12] : memref<36x256xf32, #tpu.memory_space<vmem>>, vector<4x16xf32>
    tpu.vector_store %arg7[%c4, %c0_12], %35 {strides = array<i32>} : memref<36x256xf32, #tpu.memory_space<vmem>>, vector<4x16xf32>,
    %37 = vector.extract_strided_slice %1 {offsets = [0, 0], sizes = [4, 240], strides = [1, 1]} : vector<4x256xf32> to vector<4x240xf32>
    %c4_13 = arith.constant 4 : index
    %c16 = arith.constant 16 : index
    %38 = vector.load %arg7[%c4_13, %c16] : memref<36x256xf32, #tpu.memory_space<vmem>>, vector<4x240xf32>
    tpu.vector_store %arg7[%c4_13, %c16], %37 {strides = array<i32>} : memref<36x256xf32, #tpu.memory_space<vmem>>, vector<4x240xf32>,
    %cst_14 = arith.constant 0.000000e+00 : f32
    %39 = vector.broadcast %cst_14 : f32 to vector<4x15xf32>
    %c8 = arith.constant 8 : index
    %c0_15 = arith.constant 0 : index
    %40 = vector.load %arg7[%c8, %c0_15] : memref<36x256xf32, #tpu.memory_space<vmem>>, vector<4x15xf32>
    tpu.vector_store %arg7[%c8, %c0_15], %39 {strides = array<i32>} : memref<36x256xf32, #tpu.memory_space<vmem>>, vector<4x15xf32>,
    %41 = vector.extract_strided_slice %30 {offsets = [0, 0], sizes = [4, 241], strides = [1, 1]} : vector<4x256xf32> to vector<4x241xf32>
    %c8_16 = arith.constant 8 : index
    %c15 = arith.constant 15 : index
    %42 = vector.load %arg7[%c8_16, %c15] : memref<36x256xf32, #tpu.memory_space<vmem>>, vector<4x241xf32>
    tpu.vector_store %arg7[%c8_16, %c15], %41 {strides = array<i32>} : memref<36x256xf32, #tpu.memory_space<vmem>>, vector<4x241xf32>,
    %cst_17 = arith.constant 0.000000e+00 : f32
    %43 = vector.broadcast %cst_17 : f32 to vector<4x1xf32>
    %c12 = arith.constant 12 : index
    %c0_18 = arith.constant 0 : index
    %44 = vector.load %arg7[%c12, %c0_18] : memref<36x256xf32, #tpu.memory_space<vmem>>, vector<4x1xf32>
    tpu.vector_store %arg7[%c12, %c0_18], %43 {strides = array<i32>} : memref<36x256xf32, #tpu.memory_space<vmem>>, vector<4x1xf32>,
    %45 = vector.extract_strided_slice %26 {offsets = [0, 0], sizes = [4, 255], strides = [1, 1]} : vector<4x256xf32> to vector<4x255xf32>
    %c12_19 = arith.constant 12 : index
    %c1 = arith.constant 1 : index
    %46 = vector.load %arg7[%c12_19, %c1] : memref<36x256xf32, #tpu.memory_space<vmem>>, vector<4x255xf32>
    tpu.vector_store %arg7[%c12_19, %c1], %45 {strides = array<i32>} : memref<36x256xf32, #tpu.memory_space<vmem>>, vector<4x255xf32>,
    %c16_20 = arith.constant 16 : index
    %c0_21 = arith.constant 0 : index
    %47 = vector.load %arg7[%c16_20, %c0_21] : memref<36x256xf32, #tpu.memory_space<vmem>>, vector<4x256xf32>
    tpu.vector_store %arg7[%c16_20, %c0_21], %1 {strides = array<i32>} : memref<36x256xf32, #tpu.memory_space<vmem>>, vector<4x256xf32>,
    %48 = vector.extract_strided_slice %30 {offsets = [0, 1], sizes = [4, 255], strides = [1, 1]} : vector<4x256xf32> to vector<4x255xf32>
    %c20 = arith.constant 20 : index
    %c0_22 = arith.constant 0 : index
    %49 = vector.load %arg7[%c20, %c0_22] : memref<36x256xf32, #tpu.memory_space<vmem>>, vector<4x255xf32>
    tpu.vector_store %arg7[%c20, %c0_22], %48 {strides = array<i32>} : memref<36x256xf32, #tpu.memory_space<vmem>>, vector<4x255xf32>,
    %cst_23 = arith.constant 0.000000e+00 : f32
    %50 = vector.broadcast %cst_23 : f32 to vector<4x1xf32>
    %c20_24 = arith.constant 20 : index
    %c255 = arith.constant 255 : index
    %51 = vector.load %arg7[%c20_24, %c255] : memref<36x256xf32, #tpu.memory_space<vmem>>, vector<4x1xf32>
    tpu.vector_store %arg7[%c20_24, %c255], %50 {strides = array<i32>} : memref<36x256xf32, #tpu.memory_space<vmem>>, vector<4x1xf32>,
    %52 = vector.extract_strided_slice %26 {offsets = [0, 15], sizes = [4, 241], strides = [1, 1]} : vector<4x256xf32> to vector<4x241xf32>
    %c24 = arith.constant 24 : index
    %c0_25 = arith.constant 0 : index
    %53 = vector.load %arg7[%c24, %c0_25] : memref<36x256xf32, #tpu.memory_space<vmem>>, vector<4x241xf32>
    tpu.vector_store %arg7[%c24, %c0_25], %52 {strides = array<i32>} : memref<36x256xf32, #tpu.memory_space<vmem>>, vector<4x241xf32>,
    %cst_26 = arith.constant 0.000000e+00 : f32
    %54 = vector.broadcast %cst_26 : f32 to vector<4x15xf32>
    %c24_27 = arith.constant 24 : index
    %c241 = arith.constant 241 : index
    %55 = vector.load %arg7[%c24_27, %c241] : memref<36x256xf32, #tpu.memory_space<vmem>>, vector<4x15xf32>
    tpu.vector_store %arg7[%c24_27, %c241], %54 {strides = array<i32>} : memref<36x256xf32, #tpu.memory_space<vmem>>, vector<4x15xf32>,
    %56 = vector.extract_strided_slice %1 {offsets = [0, 16], sizes = [4, 240], strides = [1, 1]} : vector<4x256xf32> to vector<4x240xf32>
    %c28 = arith.constant 28 : index
    %c0_28 = arith.constant 0 : index
    %57 = vector.load %arg7[%c28, %c0_28] : memref<36x256xf32, #tpu.memory_space<vmem>>, vector<4x240xf32>
    tpu.vector_store %arg7[%c28, %c0_28], %56 {strides = array<i32>} : memref<36x256xf32, #tpu.memory_space<vmem>>, vector<4x240xf32>,
    %cst_29 = arith.constant 0.000000e+00 : f32
    %58 = vector.broadcast %cst_29 : f32 to vector<4x16xf32>
    %c28_30 = arith.constant 28 : index
    %c240 = arith.constant 240 : index
    %59 = vector.load %arg7[%c28_30, %c240] : memref<36x256xf32, #tpu.memory_space<vmem>>, vector<4x16xf32>
    tpu.vector_store %arg7[%c28_30, %c240], %58 {strides = array<i32>} : memref<36x256xf32, #tpu.memory_space<vmem>>, vector<4x16xf32>,
    %60 = vector.extract_strided_slice %30 {offsets = [0, 17], sizes = [4, 239], strides = [1, 1]} : vector<4x256xf32> to vector<4x239xf32>
    %c32 = arith.constant 32 : index
    %c0_31 = arith.constant 0 : index
    %61 = vector.load %arg7[%c32, %c0_31] : memref<36x256xf32, #tpu.memory_space<vmem>>, vector<4x239xf32>
    tpu.vector_store %arg7[%c32, %c0_31], %60 {strides = array<i32>} : memref<36x256xf32, #tpu.memory_space<vmem>>, vector<4x239xf32>,
    %cst_32 = arith.constant 0.000000e+00 : f32
    %62 = vector.broadcast %cst_32 : f32 to vector<4x17xf32>
    %c32_33 = arith.constant 32 : index
    %c239 = arith.constant 239 : index
    %63 = vector.load %arg7[%c32_33, %c239] : memref<36x256xf32, #tpu.memory_space<vmem>>, vector<4x17xf32>
    tpu.vector_store %arg7[%c32_33, %c239], %62 {strides = array<i32>} : memref<36x256xf32, #tpu.memory_space<vmem>>, vector<4x17xf32>,
    %c0_34 = arith.constant 0 : index
    %c0_35 = arith.constant 0 : index
    %64 = vector.load %arg2[%c0_34, %c0_35] : memref<4x36xf32, #tpu.memory_space<vmem>>, vector<4x36xf32>
    %c0_36 = arith.constant 0 : index
    %c0_37 = arith.constant 0 : index
    %65 = vector.load %arg7[%c0_36, %c0_37] : memref<36x256xf32, #tpu.memory_space<vmem>>, vector<36x256xf32>
    %cst_38 = arith.constant dense<0.000000e+00> : vector<4x256xf32>
    %66 = tpu.matmul %64, %65, %cst_38 {dimension_numbers = #tpu.dot_dimension_numbers<[1], [0], [0], [1], [0, 0, 1, 1], [], []>} : vector<4x36xf32>, vector<36x256xf32>, vector<4x256xf32> -> vector<4x256xf32>
    %c0_39 = arith.constant 0 : index
    %c0_40 = arith.constant 0 : index
    %67 = vector.load %arg3[%c0_39, %c0_40] : memref<4x1xf32, #tpu.memory_space<vmem>>, vector<4x1xf32>
    %68 = vector.broadcast %67 : vector<4x1xf32> to vector<4x256xf32>
    %69 = arith.addf %66, %68 : vector<4x256xf32>
    %cst_41 = arith.constant 0.000000e+00 : f32
    %70 = vector.broadcast %cst_41 : f32 to vector<4x256xf32>
    %71 = arith.maximumf %69, %70 : vector<4x256xf32>
    %cst_42 = arith.constant 0.000000e+00 : f32
    %72 = vector.shape_cast %22 : vector<1x256xi1> to vector<1x256xi1>
    %73 = vector.broadcast %72 : vector<1x256xi1> to vector<4x256xi1>
    %74 = vector.broadcast %cst_42 : f32 to vector<4x256xf32>
    %75 = arith.select %73, %71, %74 : vector<4x256xi1>, vector<4x256xf32>
    %cst_43 = arith.constant 0.000000e+00 : f32
    %76 = vector.shape_cast %20 : vector<1x256xi1> to vector<1x256xi1>
    %77 = vector.broadcast %76 : vector<1x256xi1> to vector<4x256xi1>
    %78 = vector.broadcast %cst_43 : f32 to vector<4x256xf32>
    %79 = arith.select %77, %71, %78 : vector<4x256xi1>, vector<4x256xf32>
    %cst_44 = arith.constant 0.000000e+00 : f32
    %80 = vector.broadcast %cst_44 : f32 to vector<4x17xf32>
    %c0_45 = arith.constant 0 : index
    %c0_46 = arith.constant 0 : index
    %81 = vector.load %arg7[%c0_45, %c0_46] : memref<36x256xf32, #tpu.memory_space<vmem>>, vector<4x17xf32>
    tpu.vector_store %arg7[%c0_45, %c0_46], %80 {strides = array<i32>} : memref<36x256xf32, #tpu.memory_space<vmem>>, vector<4x17xf32>,
    %82 = vector.extract_strided_slice %75 {offsets = [0, 0], sizes = [4, 239], strides = [1, 1]} : vector<4x256xf32> to vector<4x239xf32>
    %c0_47 = arith.constant 0 : index
    %c17_48 = arith.constant 17 : index
    %83 = vector.load %arg7[%c0_47, %c17_48] : memref<36x256xf32, #tpu.memory_space<vmem>>, vector<4x239xf32>
    tpu.vector_store %arg7[%c0_47, %c17_48], %82 {strides = array<i32>} : memref<36x256xf32, #tpu.memory_space<vmem>>, vector<4x239xf32>,
    %cst_49 = arith.constant 0.000000e+00 : f32
    %84 = vector.broadcast %cst_49 : f32 to vector<4x16xf32>
    %c4_50 = arith.constant 4 : index
    %c0_51 = arith.constant 0 : index
    %85 = vector.load %arg7[%c4_50, %c0_51] : memref<36x256xf32, #tpu.memory_space<vmem>>, vector<4x16xf32>
    tpu.vector_store %arg7[%c4_50, %c0_51], %84 {strides = array<i32>} : memref<36x256xf32, #tpu.memory_space<vmem>>, vector<4x16xf32>,
    %86 = vector.extract_strided_slice %71 {offsets = [0, 0], sizes = [4, 240], strides = [1, 1]} : vector<4x256xf32> to vector<4x240xf32>
    %c4_52 = arith.constant 4 : index
    %c16_53 = arith.constant 16 : index
    %87 = vector.load %arg7[%c4_52, %c16_53] : memref<36x256xf32, #tpu.memory_space<vmem>>, vector<4x240xf32>
    tpu.vector_store %arg7[%c4_52, %c16_53], %86 {strides = array<i32>} : memref<36x256xf32, #tpu.memory_space<vmem>>, vector<4x240xf32>,
    %cst_54 = arith.constant 0.000000e+00 : f32
    %88 = vector.broadcast %cst_54 : f32 to vector<4x15xf32>
    %c8_55 = arith.constant 8 : index
    %c0_56 = arith.constant 0 : index
    %89 = vector.load %arg7[%c8_55, %c0_56] : memref<36x256xf32, #tpu.memory_space<vmem>>, vector<4x15xf32>
    tpu.vector_store %arg7[%c8_55, %c0_56], %88 {strides = array<i32>} : memref<36x256xf32, #tpu.memory_space<vmem>>, vector<4x15xf32>,
    %90 = vector.extract_strided_slice %79 {offsets = [0, 0], sizes = [4, 241], strides = [1, 1]} : vector<4x256xf32> to vector<4x241xf32>
    %c8_57 = arith.constant 8 : index
    %c15_58 = arith.constant 15 : index
    %91 = vector.load %arg7[%c8_57, %c15_58] : memref<36x256xf32, #tpu.memory_space<vmem>>, vector<4x241xf32>
    tpu.vector_store %arg7[%c8_57, %c15_58], %90 {strides = array<i32>} : memref<36x256xf32, #tpu.memory_space<vmem>>, vector<4x241xf32>,
    %cst_59 = arith.constant 0.000000e+00 : f32
    %92 = vector.broadcast %cst_59 : f32 to vector<4x1xf32>
    %c12_60 = arith.constant 12 : index
    %c0_61 = arith.constant 0 : index
    %93 = vector.load %arg7[%c12_60, %c0_61] : memref<36x256xf32, #tpu.memory_space<vmem>>, vector<4x1xf32>
    tpu.vector_store %arg7[%c12_60, %c0_61], %92 {strides = array<i32>} : memref<36x256xf32, #tpu.memory_space<vmem>>, vector<4x1xf32>,
    %94 = vector.extract_strided_slice %75 {offsets = [0, 0], sizes = [4, 255], strides = [1, 1]} : vector<4x256xf32> to vector<4x255xf32>
    %c12_62 = arith.constant 12 : index
    %c1_63 = arith.constant 1 : index
    %95 = vector.load %arg7[%c12_62, %c1_63] : memref<36x256xf32, #tpu.memory_space<vmem>>, vector<4x255xf32>
    tpu.vector_store %arg7[%c12_62, %c1_63], %94 {strides = array<i32>} : memref<36x256xf32, #tpu.memory_space<vmem>>, vector<4x255xf32>,
    %c16_64 = arith.constant 16 : index
    %c0_65 = arith.constant 0 : index
    %96 = vector.load %arg7[%c16_64, %c0_65] : memref<36x256xf32, #tpu.memory_space<vmem>>, vector<4x256xf32>
    tpu.vector_store %arg7[%c16_64, %c0_65], %71 {strides = array<i32>} : memref<36x256xf32, #tpu.memory_space<vmem>>, vector<4x256xf32>,
    %97 = vector.extract_strided_slice %79 {offsets = [0, 1], sizes = [4, 255], strides = [1, 1]} : vector<4x256xf32> to vector<4x255xf32>
    %c20_66 = arith.constant 20 : index
    %c0_67 = arith.constant 0 : index
    %98 = vector.load %arg7[%c20_66, %c0_67] : memref<36x256xf32, #tpu.memory_space<vmem>>, vector<4x255xf32>
    tpu.vector_store %arg7[%c20_66, %c0_67], %97 {strides = array<i32>} : memref<36x256xf32, #tpu.memory_space<vmem>>, vector<4x255xf32>,
    %cst_68 = arith.constant 0.000000e+00 : f32
    %99 = vector.broadcast %cst_68 : f32 to vector<4x1xf32>
    %c20_69 = arith.constant 20 : index
    %c255_70 = arith.constant 255 : index
    %100 = vector.load %arg7[%c20_69, %c255_70] : memref<36x256xf32, #tpu.memory_space<vmem>>, vector<4x1xf32>
    tpu.vector_store %arg7[%c20_69, %c255_70], %99 {strides = array<i32>} : memref<36x256xf32, #tpu.memory_space<vmem>>, vector<4x1xf32>,
    %101 = vector.extract_strided_slice %75 {offsets = [0, 15], sizes = [4, 241], strides = [1, 1]} : vector<4x256xf32> to vector<4x241xf32>
    %c24_71 = arith.constant 24 : index
    %c0_72 = arith.constant 0 : index
    %102 = vector.load %arg7[%c24_71, %c0_72] : memref<36x256xf32, #tpu.memory_space<vmem>>, vector<4x241xf32>
    tpu.vector_store %arg7[%c24_71, %c0_72], %101 {strides = array<i32>} : memref<36x256xf32, #tpu.memory_space<vmem>>, vector<4x241xf32>,
    %cst_73 = arith.constant 0.000000e+00 : f32
    %103 = vector.broadcast %cst_73 : f32 to vector<4x15xf32>
    %c24_74 = arith.constant 24 : index
    %c241_75 = arith.constant 241 : index
    %104 = vector.load %arg7[%c24_74, %c241_75] : memref<36x256xf32, #tpu.memory_space<vmem>>, vector<4x15xf32>
    tpu.vector_store %arg7[%c24_74, %c241_75], %103 {strides = array<i32>} : memref<36x256xf32, #tpu.memory_space<vmem>>, vector<4x15xf32>,
    %105 = vector.extract_strided_slice %71 {offsets = [0, 16], sizes = [4, 240], strides = [1, 1]} : vector<4x256xf32> to vector<4x240xf32>
    %c28_76 = arith.constant 28 : index
    %c0_77 = arith.constant 0 : index
    %106 = vector.load %arg7[%c28_76, %c0_77] : memref<36x256xf32, #tpu.memory_space<vmem>>, vector<4x240xf32>
    tpu.vector_store %arg7[%c28_76, %c0_77], %105 {strides = array<i32>} : memref<36x256xf32, #tpu.memory_space<vmem>>, vector<4x240xf32>,
    %cst_78 = arith.constant 0.000000e+00 : f32
    %107 = vector.broadcast %cst_78 : f32 to vector<4x16xf32>
    %c28_79 = arith.constant 28 : index
    %c240_80 = arith.constant 240 : index
    %108 = vector.load %arg7[%c28_79, %c240_80] : memref<36x256xf32, #tpu.memory_space<vmem>>, vector<4x16xf32>
    tpu.vector_store %arg7[%c28_79, %c240_80], %107 {strides = array<i32>} : memref<36x256xf32, #tpu.memory_space<vmem>>, vector<4x16xf32>,
    %109 = vector.extract_strided_slice %79 {offsets = [0, 17], sizes = [4, 239], strides = [1, 1]} : vector<4x256xf32> to vector<4x239xf32>
    %c32_81 = arith.constant 32 : index
    %c0_82 = arith.constant 0 : index
    %110 = vector.load %arg7[%c32_81, %c0_82] : memref<36x256xf32, #tpu.memory_space<vmem>>, vector<4x239xf32>
    tpu.vector_store %arg7[%c32_81, %c0_82], %109 {strides = array<i32>} : memref<36x256xf32, #tpu.memory_space<vmem>>, vector<4x239xf32>,
    %cst_83 = arith.constant 0.000000e+00 : f32
    %111 = vector.broadcast %cst_83 : f32 to vector<4x17xf32>
    %c32_84 = arith.constant 32 : index
    %c239_85 = arith.constant 239 : index
    %112 = vector.load %arg7[%c32_84, %c239_85] : memref<36x256xf32, #tpu.memory_space<vmem>>, vector<4x17xf32>
    tpu.vector_store %arg7[%c32_84, %c239_85], %111 {strides = array<i32>} : memref<36x256xf32, #tpu.memory_space<vmem>>, vector<4x17xf32>,
    %c0_86 = arith.constant 0 : index
    %c0_87 = arith.constant 0 : index
    %113 = vector.load %arg4[%c0_86, %c0_87] : memref<4x36xf32, #tpu.memory_space<vmem>>, vector<4x36xf32>
    %c0_88 = arith.constant 0 : index
    %c0_89 = arith.constant 0 : index
    %114 = vector.load %arg7[%c0_88, %c0_89] : memref<36x256xf32, #tpu.memory_space<vmem>>, vector<36x256xf32>
    %cst_90 = arith.constant dense<0.000000e+00> : vector<4x256xf32>
    %115 = tpu.matmul %113, %114, %cst_90 {dimension_numbers = #tpu.dot_dimension_numbers<[1], [0], [0], [1], [0, 0, 1, 1], [], []>} : vector<4x36xf32>, vector<36x256xf32>, vector<4x256xf32> -> vector<4x256xf32>
    %c0_91 = arith.constant 0 : index
    %c0_92 = arith.constant 0 : index
    %116 = vector.load %arg5[%c0_91, %c0_92] : memref<4x1xf32, #tpu.memory_space<vmem>>, vector<4x1xf32>
    %117 = vector.broadcast %116 : vector<4x1xf32> to vector<4x256xf32>
    %118 = arith.addf %115, %117 : vector<4x256xf32>
    %cst_93 = arith.constant 0.000000e+00 : f32
    %119 = vector.broadcast %cst_93 : f32 to vector<4x256xf32>
    %120 = arith.maximumf %118, %119 : vector<4x256xf32>
    %121 = arith.addf %120, %1 : vector<4x256xf32>
    %c0_94 = arith.constant 0 : index
    %c0_95 = arith.constant 0 : index
    %c0_96 = arith.constant 0 : index
    %122 = vector.load %arg6[%c0_94, %c0_95, %c0_96] : memref<1x4x256xf32, #tpu.memory_space<vmem>>, vector<1x4x256xf32>
    %123 = vector.shape_cast %122 : vector<1x4x256xf32> to vector<4x256xf32>
    %124 = vector.shape_cast %121 : vector<4x256xf32> to vector<1x4x256xf32>
    tpu.vector_store %arg6[%c0_94, %c0_95, %c0_96], %124 {strides = array<i32>} : memref<1x4x256xf32, #tpu.memory_space<vmem>>, vector<1x4x256xf32>,
    return
  }
  func.func @transform_0(%arg0: i32) -> (i32, i32, i32) {
    %c0_i32 = arith.constant 0 : i32
    %c0_i32_0 = arith.constant 0 : i32
    %c0_i32_1 = arith.constant 0 : i32
    return %arg0, %c0_i32, %c0_i32_0 : i32, i32, i32
  }
  func.func @transform_1(%arg0: i32) -> (i32, i32) {
    %c0_i32 = arith.constant 0 : i32
    %c0_i32_0 = arith.constant 0 : i32
    %c0_i32_1 = arith.constant 0 : i32
    return %c0_i32, %c0_i32_0 : i32, i32
  }
  func.func @transform_2(%arg0: i32) -> (i32, i32) {
    %c0_i32 = arith.constant 0 : i32
    %c0_i32_0 = arith.constant 0 : i32
    %c0_i32_1 = arith.constant 0 : i32
    return %c0_i32, %c0_i32_0 : i32, i32
  }
  func.func @transform_3(%arg0: i32) -> (i32, i32) {
    %c0_i32 = arith.constant 0 : i32
    %c0_i32_0 = arith.constant 0 : i32
    %c0_i32_1 = arith.constant 0 : i32
    return %c0_i32, %c0_i32_0 : i32, i32
  }
  func.func @transform_4(%arg0: i32) -> (i32, i32) {
    %c0_i32 = arith.constant 0 : i32
    %c0_i32_0 = arith.constant 0 : i32
    %c0_i32_1 = arith.constant 0 : i32
    return %c0_i32, %c0_i32_0 : i32, i32
  }
  func.func @transform_5(%arg0: i32) -> (i32, i32, i32) {
    %c0_i32 = arith.constant 0 : i32
    %c0_i32_0 = arith.constant 0 : i32
    %c0_i32_1 = arith.constant 0 : i32
    return %arg0, %c0_i32, %c0_i32_0 : i32, i32, i32
  }
}

</mosaic_0001>

<llo_original>
// kernel: tpu_custom_call.1
$region0: #{tpu_custom_call.1}
  #allocation0 [shape = 'u32[]', space=smem, size = 0x4, offset = 0x4, fixed_abs, tag = 'smem constant byte address 0x4 - core index']
  #allocation1 [shape = 'u32[144,128]{1,0:T(1,128)}', space=vmem, size = 0x12000, scoped, tag = 'internal scratch']
  #allocation2 [shape = 'f32[36,256]{1,0:T(8,128)}', space=vmem, size = 0xa000, scoped, tag = 'scratch operand']
  %s0 = inlined_call_operand.hbm [shape: f32[2,4,256], index: 0, kind: input, shape index: {}]
  %s1 = inlined_call_operand.vmem [shape: f32[4,36], index: 1, kind: input, shape index: {}]
  %s2 = inlined_call_operand.vmem [shape: f32[4,1], index: 2, kind: input, shape index: {}]
  %s3 = inlined_call_operand.vmem [shape: f32[4,36], index: 3, kind: input, shape index: {}]
  %s4 = inlined_call_operand.vmem [shape: f32[4,1], index: 4, kind: input, shape index: {}]
  %s5 = inlined_call_operand.hbm [shape: f32[2,4,256], index: 5, kind: output, shape index: {}]
  %s6 = sld [smem:[#allocation0]]
  $region57: #{tpu_custom_call.1} parent=0
    _
  %s8 = ssub.s32 1, %s6
  %s9 = scalar_select 0, %s8, %s6
  $region1: #{tpu_custom_call.1} parent=0
    #allocation3 [shape = 'u8[8192]{0}', space=vmem, size = 0x2000, scoped, tag = 'input window, operand 0']
    #allocation4 [shape = 's32[2]{0}', space=sflag, size = 0x8, scoped, tag = 'scoped memory for tpu_custom_call.1']
    #allocation5 [shape = 's32[2]{0}', space=sflag, size = 0x8, scoped, tag = 'scoped memory for tpu_custom_call.1']
    #allocation6 [shape = 'u8[8192]{0}', space=vmem, size = 0x2000, scoped, tag = 'output window, operand 0']
    %10 = vsyncpa [#allocation4], 0
    %s11 = scalar_lea.sflag [#allocation4], 1
    %12 = vsyncpa %s11, 0
    %13 = vsyncpa [#allocation5], 0
    %s14 = scalar_lea.sflag [#allocation5], 1
    %15 = vsyncpa %s14, 0
    loop: start=0, step=1, limit=4
    $region2: #{tpu_custom_call.1} parent=1 // loop_pre_header
      _
    $region3: #{tpu_custom_call.1} parent=1 // loop_header
      %s17 = sphi 0, %s21
      %p18 = scmp.ge.s32.totalorder %s17, 4
      %s27 = sphi 0, %s29
      %s30 = sphi 0, %s27
      %s31 = sphi 0, %s30
      %s47 = sphi 0, %s31
      %s51 = sphi 0, %s51
      %s53 = sphi 0, %s51
      %s54 = sphi 0, %s53
      %s68 = sphi 0, %s54
      %s72 = sphi 0, %s72
      %s74 = sphi 0, %s72
      %s75 = sphi 0, %s74
      %s89 = sphi 0, %s75
      %s93 = sphi 0, %s93
      %s95 = sphi 0, %s93
      %s96 = sphi 0, %s95
      %s110 = sphi 0, %s96
      %s114 = sphi 0, %s114
      %s116 = sphi 0, %s114
      %s117 = sphi 0, %s116
      %s131 = sphi 0, %s117
      %s137 = sphi 0, %s139
      %s140 = sphi 0, %s137
      %s141 = sphi 0, %s140
      %s157 = sphi 0, %s141
    $region4: #{tpu_custom_call.1} parent=1 // loop_header_branch
      %20 = sbr.rel (%p18) target = $region8
    $region5: #{tpu_custom_call.1} parent=1 // loop_body
      %s22 = ssub.s32 %s17, 1
      %s23 = ssub.s32 %s17, 2
      %s24 = sadd.s32 %s17, 1
      %s25 = ssub.s32 %s17, %s24
      %p26 = scmp.eq.s32.totalorder %s25, 0
      %s28 = sadd.s32 %s27, 1
      %s29 = scalar_select %p26, %s27, %s28
      %p32 = pneg %p26
      %p33 = scmp.eq.s32.totalorder %s17, 1
      %p34 = por %p32, %p33
      %p35 = scmp.ne.s32.totalorder %s27, %s30
      %p36 = scmp.eq.s32.totalorder %s17, 0
      %p37 = por %p35, %p36
      %p38 = scmp.ne.s32.totalorder %s27, %s30
      %p39 = scmp.eq.s32.totalorder %s22, 1
      %p40 = por %p38, %p39
      %p41 = scmp.ne.s32.totalorder %s30, %s31
      %p42 = scmp.eq.s32.totalorder %s22, 0
      %p43 = por %p41, %p42
      %p44 = scmp.ne.s32.totalorder %s30, %s31
      %p45 = scmp.eq.s32.totalorder %s23, 1
      %p46 = por %p44, %p45
      %p48 = scmp.ne.s32.totalorder %s31, %s47
      %p49 = scmp.eq.s32.totalorder %s23, 0
      %p50 = por %p48, %p49
      %s52 = sadd.s32 %s51, 1
      %p55 = scmp.eq.s32.totalorder %s17, 1
      %p56 = scmp.ne.s32.totalorder %s51, %s53
      %p57 = scmp.eq.s32.totalorder %s17, 0
      %p58 = por %p56, %p57
      %p59 = scmp.ne.s32.totalorder %s51, %s53
      %p60 = scmp.eq.s32.totalorder %s22, 1
      %p61 = por %p59, %p60
      %p62 = scmp.ne.s32.totalorder %s53, %s54
      %p63 = scmp.eq.s32.totalorder %s22, 0
      %p64 = por %p62, %p63
      %p65 = scmp.ne.s32.totalorder %s53, %s54
      %p66 = scmp.eq.s32.totalorder %s23, 1
      %p67 = por %p65, %p66
      %p69 = scmp.ne.s32.totalorder %s54, %s68
      %p70 = scmp.eq.s32.totalorder %s23, 0
      %p71 = por %p69, %p70
      %s73 = sadd.s32 %s72, 1
      %p76 = scmp.eq.s32.totalorder %s17, 1
      %p77 = scmp.ne.s32.totalorder %s72, %s74
      %p78 = scmp.eq.s32.totalorder %s17, 0
      %p79 = por %p77, %p78
      %p80 = scmp.ne.s32.totalorder %s72, %s74
      %p81 = scmp.eq.s32.totalorder %s22, 1
      %p82 = por %p80, %p81
      %p83 = scmp.ne.s32.totalorder %s74, %s75
      %p84 = scmp.eq.s32.totalorder %s22, 0
      %p85 = por %p83, %p84
      %p86 = scmp.ne.s32.totalorder %s74, %s75
      %p87 = scmp.eq.s32.totalorder %s23, 1
      %p88 = por %p86, %p87
      %p90 = scmp.ne.s32.totalorder %s75, %s89
      %p91 = scmp.eq.s32.totalorder %s23, 0
      %p92 = por %p90, %p91
      %s94 = sadd.s32 %s93, 1
      %p97 = scmp.eq.s32.totalorder %s17, 1
      %p98 = scmp.ne.s32.totalorder %s93, %s95
      %p99 = scmp.eq.s32.totalorder %s17, 0
      %p100 = por %p98, %p99
      %p101 = scmp.ne.s32.totalorder %s93, %s95
      %p102 = scmp.eq.s32.totalorder %s22, 1
      %p103 = por %p101, %p102
      %p104 = scmp.ne.s32.totalorder %s95, %s96
      %p105 = scmp.eq.s32.totalorder %s22, 0
      %p106 = por %p104, %p105
      %p107 = scmp.ne.s32.totalorder %s95, %s96
      %p108 = scmp.eq.s32.totalorder %s23, 1
      %p109 = por %p107, %p108
      %p111 = scmp.ne.s32.totalorder %s96, %s110
      %p112 = scmp.eq.s32.totalorder %s23, 0
      %p113 = por %p111, %p112
      %s115 = sadd.s32 %s114, 1
      %p118 = scmp.eq.s32.totalorder %s17, 1
      %p119 = scmp.ne.s32.totalorder %s114, %s116
      %p120 = scmp.eq.s32.totalorder %s17, 0
      %p121 = por %p119, %p120
      %p122 = scmp.ne.s32.totalorder %s114, %s116
      %p123 = scmp.eq.s32.totalorder %s22, 1
      %p124 = por %p122, %p123
      %p125 = scmp.ne.s32.totalorder %s116, %s117
      %p126 = scmp.eq.s32.totalorder %s22, 0
      %p127 = por %p125, %p126
      %p128 = scmp.ne.s32.totalorder %s116, %s117
      %p129 = scmp.eq.s32.totalorder %s23, 1
      %p130 = por %p128, %p129
      %p132 = scmp.ne.s32.totalorder %s117, %s131
      %p133 = scmp.eq.s32.totalorder %s23, 0
      %p134 = por %p132, %p133
      %s135 = ssub.s32 %s17, %s24
      %p136 = scmp.eq.s32.totalorder %s135, 0
      %s138 = sadd.s32 %s137, 1
      %s139 = scalar_select %p136, %s137, %s138
      %p142 = pneg %p136
      %p143 = scmp.eq.s32.totalorder %s17, 1
      %p144 = por %p142, %p143
      %p145 = scmp.ne.s32.totalorder %s137, %s140
      %p146 = scmp.eq.s32.totalorder %s17, 0
      %p147 = por %p145, %p146
      %p148 = scmp.ne.s32.totalorder %s137, %s140
      %p149 = scmp.eq.s32.totalorder %s22, 1
      %p150 = por %p148, %p149
      %p151 = scmp.ne.s32.totalorder %s140, %s141
      %p152 = scmp.eq.s32.totalorder %s22, 0
      %p153 = por %p151, %p152
      %p154 = scmp.ne.s32.totalorder %s140, %s141
      %p155 = scmp.eq.s32.totalorder %s23, 1
      %p156 = por %p154, %p155
      %p158 = scmp.ne.s32.totalorder %s141, %s157
      %p159 = scmp.eq.s32.totalorder %s23, 0
      %p160 = por %p158, %p159
      %p161 = scmp.le.s32.totalorder 1, %s17
      %p162 = scmp.lt.s32.totalorder %s17, 3
      %p163 = pnand %p161, %p162
      %p164 = pneg %p163
      // Predicated region
      $region9: #{tpu_custom_call.1} parent=5 // pred_check
        _
      $region10: #{tpu_custom_call.1} parent=5 // pred_check_branch
        %166 = sbr.rel (%p163) target = $region12
      $region11: #{tpu_custom_call.1} parent=5 // pred_region
        %s167 = ssub.s32 %s17, 1
        // Predicated region
        $region13: #{tpu_custom_call.1} parent=11 // pred_check
          %p168 = pneg %p64
        $region14: #{tpu_custom_call.1} parent=11 // pred_check_branch
          %170 = sbr.rel (%p168) target = $region16
        $region15: #{tpu_custom_call.1} parent=11 // pred_region
          _
        $region16: #{tpu_custom_call.1} parent=11 // pred_fallthru
          _
        // Predicated region
        $region17: #{tpu_custom_call.1} parent=11 // pred_check
          %p171 = pneg %p85
        $region18: #{tpu_custom_call.1} parent=11 // pred_check_branch
          %173 = sbr.rel (%p171) target = $region20
        $region19: #{tpu_custom_call.1} parent=11 // pred_region
          _
        $region20: #{tpu_custom_call.1} parent=11 // pred_fallthru
          _
        // Predicated region
        $region21: #{tpu_custom_call.1} parent=11 // pred_check
          %p174 = pneg %p106
        $region22: #{tpu_custom_call.1} parent=11 // pred_check_branch
          %176 = sbr.rel (%p174) target = $region24
        $region23: #{tpu_custom_call.1} parent=11 // pred_region
          _
        $region24: #{tpu_custom_call.1} parent=11 // pred_fallthru
          _
        // Predicated region
        $region25: #{tpu_custom_call.1} parent=11 // pred_check
          %p177 = pneg %p127
        $region26: #{tpu_custom_call.1} parent=11 // pred_check_branch
          %179 = sbr.rel (%p177) target = $region28
        $region27: #{tpu_custom_call.1} parent=11 // pred_region
          _
        $region28: #{tpu_custom_call.1} parent=11 // pred_fallthru
          _
      $region12: #{tpu_custom_call.1} parent=5 // pred_fallthru
        _
      %p180 = scmp.lt.s32.totalorder %s17, 2
      // Predicated region
      $region29: #{tpu_custom_call.1} parent=5 // pred_check
        %p181 = pneg %p180
      $region30: #{tpu_custom_call.1} parent=5 // pred_check_branch
        %183 = sbr.rel (%p181) target = $region32
      $region31: #{tpu_custom_call.1} parent=5 // pred_region
        // Predicated region
        $region33: #{tpu_custom_call.1} parent=31 // pred_check
          %p184 = pneg %p37
        $region34: #{tpu_custom_call.1} parent=31 // pred_check_branch
          %186 = sbr.rel (%p184) target = $region36
        $region35: #{tpu_custom_call.1} parent=31 // pred_region
          %s187 = sand.u32 %s27, 1
          %s188 = scalar_lea.sflag [#allocation4], %s187
          %s189 = sand.u32 %s27, 1
          %s190 = smul.addr %s189, 8
          %s191 = scalar_lea.vmem [#allocation3], %s190
          %s193 = ssub.s32 128, 128
          %194 = vsyncadd %s188, %s193
          %s195 = smul.addr %s17, 2
          %s196 = smul.addr %s195, 64
          %s197 = scalar_lea.hbm %s0, %s196
          %s199 = sshll.u32 %s191, 4
          %s200 = int_to_ptr.vmem [resolvable:$true] %s199
          %202 = dma.hbm_to_vmem [thread:$0]  %s197, 128, %s200, %s188
        $region36: #{tpu_custom_call.1} parent=31 // pred_fallthru
          _
      $region32: #{tpu_custom_call.1} parent=5 // pred_fallthru
        _
      %p203 = scmp.le.s32.totalorder 1, %s17
      %p204 = scmp.lt.s32.totalorder %s17, 3
      %p205 = pnand %p203, %p204
      %p206 = pneg %p205
      // Predicated region
      $region37: #{tpu_custom_call.1} parent=5 // pred_check
        _
      $region38: #{tpu_custom_call.1} parent=5 // pred_check_branch
        %208 = sbr.rel (%p205) target = $region40
      $region39: #{tpu_custom_call.1} parent=5 // pred_region
        %s209 = ssub.s32 %s17, 1
        %s210 = sand.u32 %s30, 1
        %s211 = scalar_lea.sflag [#allocation4], %s210
        %s212 = sand.u32 %s30, 1
        %s213 = smul.addr %s212, 8
        %s214 = scalar_lea.vmem [#allocation3], %s213
        // Predicated region
        $region41: #{tpu_custom_call.1} parent=39 // pred_check
          %p215 = pneg %p43
        $region42: #{tpu_custom_call.1} parent=39 // pred_check_branch
          %217 = sbr.rel (%p215) target = $region44
        $region43: #{tpu_custom_call.1} parent=39 // pred_region
          %218 = dma.done %s211, 128
        $region44: #{tpu_custom_call.1} parent=39 // pred_fallthru
          _
        %s219 = sand.u32 %s30, 1
        %s220 = scalar_lea.sflag [#allocation4], %s219
        %s221 = sand.u32 %s30, 1
        %s222 = smul.addr %s221, 8
        %s223 = scalar_lea.vmem [#allocation3], %s222
        %p224 = pneg %p43
        %p225 = pneg %p40
        %p226 = pneg %p64
        %p227 = pneg %p61
        %p228 = pneg %p85
        %p229 = pneg %p82
        %p230 = pneg %p106
        %p231 = pneg %p103
        %p232 = pneg %p127
        %p233 = pneg %p124
        %p234 = pneg %p153
        %p235 = pneg %p150
        %s236 = sand.u32 %s140, 1
        %s237 = scalar_lea.sflag [#allocation5], %s236
        %s238 = sand.u32 %s140, 1
        %s239 = smul.addr %s238, 8
        %s240 = scalar_lea.vmem [#allocation6], %s239
        %v241 = vld [vmem:[%s214] sm:$0xff]
        %v242 = vlaneseq
        %v243 = vand.u32 %v242, 127
        %v244 = vadd.s32 %v243, 128
        %vm245 = vcmp.lt.s32.totalorder %v243, 0
        %v246 = vsub.s32 0, %v243
        %v247 = vsel %vm245, %v246, %v243
        %v248 = vshrl.u32 %v247, 4
        %v249 = vand.u32 %v247, 15
        %v250 = vsub.s32 0, %v249
        %v251 = vsel %vm245, %v250, %v249
        %vm252 = vcmp.lt.s32.totalorder %v244, 0
        %v253 = vsub.s32 0, %v244
        %v254 = vsel %vm252, %v253, %v244
        %v255 = vshrl.u32 %v254, 4
        %v256 = vand.u32 %v254, 15
        %v257 = vsub.s32 0, %v256
        %v258 = vsel %vm252, %v257, %v256
        %vm259 = vcmp.ne.s32.totalorder %v251, 0
        %vm260 = vcmp.ne.s32.totalorder %v258, 0
        %vm261 = vcmp.lt.s32.totalorder %v251, 0
        %vm262 = vcmp.lt.s32.totalorder %v258, 0
        %vm263 = vmand %vm261, %vm259
        %vm264 = vmand %vm262, %vm260
        %v265 = vadd.s32 %v251, 16
        %v266 = vadd.s32 %v258, 16
        %v267 = vsel %vm263, %v265, %v251
        %v268 = vsel %vm264, %v266, %v258
        %vm269 = vcmp.ge.s32.totalorder %v267, 1
        %vm270 = vcmp.ge.s32.totalorder %v268, 1
        %vm271 = vcmp.le.s32.totalorder %v267, 14
        %vm272 = vcmp.le.s32.totalorder %v268, 14
        %v273 = vsel %vm271, 1, 0
        %v274 = vsel %vm272, 1, 0
        %vm275 = vcmp.eq.s32.totalorder %v273, 1
        %vm276 = vcmp.eq.s32.totalorder %v274, 1
        %v278 = vcombine.high %v241, %v241
        %v280 = vsel %vm275, %v241, 0.0
        %v281 = vsel %vm276, %v278, 0.0
        %v282 = vsel %vm269, 1, 0
        %v283 = vsel %vm270, 1, 0
        %vm284 = vcmp.eq.s32.totalorder %v282, 1
        %vm285 = vcmp.eq.s32.totalorder %v283, 1
        %v286 = vsel %vm284, %v241, 0.0
        %v287 = vsel %vm285, %v278, 0.0
        %vm288 = vcmask 134144
        %289 = vst.msk [vmem:[#allocation2] sm:$0xf] %vm288, 0.0
        %292 = vrot.lane.b32.xlu0 %v280, 17
        %v293 = vpop.permute.xlu0 %292
        %294 = vrot.lane.b32.xlu0 %v281, 17
        %v295 = vpop.permute.xlu0 %294
        %vm296 = vcmask 138240
        %v297 = vsel %vm296, %v293, %v295
        %vm300 = vcmask 1043592
        %301 = vst.msk [vmem:[#allocation2] sm:$0xf] %vm300, %v293
        %302 = vst [vmem:[#allocation2 + $0x8] sm:$0xf] %v297
        %vm303 = vcmask 130052
        %304 = vst.msk [vmem:[#allocation2] sm:$0xf0] %vm303, 0.0
        %v305 = vcombine.low %v241, %v241
        %306 = vrot.lane.b32.xlu0 %v305, 16
        %v307 = vpop.permute.xlu0 %306
        %308 = vrot.lane.b32.xlu0 %v241, 16
        %v309 = vpop.permute.xlu0 %308
        %vm310 = vcmask 130048
        %v311 = vsel %vm310, %v307, %v309
        %vm314 = vcmask 1047684
        %315 = vst.msk [vmem:[#allocation2] sm:$0xf0] %vm314, %v307
        %316 = vst [vmem:[#allocation2 + $0x8] sm:$0xf0] %v311
        %vm317 = vcmask 117760
        %318 = vst.msk [vmem:[#allocation2 + $0x10] sm:$0xf] %vm317, 0.0
        %321 = vrot.lane.b32.xlu0 %v286, 15
        %v322 = vpop.permute.xlu0 %321
        %323 = vrot.lane.b32.xlu0 %v287, 15
        %v324 = vpop.permute.xlu0 %323
        %vm325 = vcmask 121856
        %v326 = vsel %vm325, %v322, %v324
        %vm329 = vcmask 1043576
        %330 = vst.msk [vmem:[#allocation2 + $0x10] sm:$0xf] %vm329, %v322
        %331 = vst [vmem:[#allocation2 + $0x18] sm:$0xf] %v326
        %vm332 = vcmask 7172
        %333 = vst.msk [vmem:[#allocation2 + $0x10] sm:$0xf0] %vm332, 0.0
        %v334 = vrot.slane %v280, 4
        %v335 = vrot.slane %v281, 4
        %336 = vrot.lane.b32.xlu0 %v334, 1
        %v337 = vpop.permute.xlu0 %336
        %338 = vrot.lane.b32.xlu0 %v335, 1
        %v339 = vpop.permute.xlu0 %338
        %vm340 = vcmask 7168
        %v341 = vsel %vm340, %v337, %v339
        %vm344 = vcmask 1047564
        %345 = vst.msk [vmem:[#allocation2 + $0x10] sm:$0xf0] %vm344, %v337
        %346 = vst [vmem:[#allocation2 + $0x18] sm:$0xf0] %v341
        %347 = vst [vmem:[#allocation2 + $0x20] sm:$0xf] %v241
        %348 = vst [vmem:[#allocation2 + $0x28] sm:$0xf] %v278
        %v349 = vrot.slane %v286, 4
        %v350 = vrot.slane %v287, 4
        %351 = vrot.lane.b32.xlu0 %v349, 127
        %v352 = vpop.permute.xlu0 %351
        %353 = vrot.lane.b32.xlu0 %v350, 127
        %v354 = vpop.permute.xlu0 %353
        %vm355 = vcmask 1039360
        %v356 = vsel %vm355, %v352, %v354
        %359 = vst [vmem:[#allocation2 + $0x20] sm:$0xf0] %v356
        %vm360 = vcmask 1039364
        %361 = vst.msk [vmem:[#allocation2 + $0x28] sm:$0xf0] %vm360, %v354
        %vm362 = vcmask 1048572
        %363 = vst.msk [vmem:[#allocation2 + $0x28] sm:$0xf0] %vm362, 0.0
        %364 = vrot.lane.b32.xlu0 %v280, 113
        %v365 = vpop.permute.xlu0 %364
        %366 = vrot.lane.b32.xlu0 %v281, 113
        %v367 = vpop.permute.xlu0 %366
        %vm368 = vcmask 924672
        %v369 = vsel %vm368, %v365, %v367
        %372 = vst [vmem:[#allocation2 + $0x30] sm:$0xf] %v369
        %vm373 = vcmask 920576
        %374 = vst.msk [vmem:[#allocation2 + $0x38] sm:$0xf] %vm373, %v367
        %vm375 = vcmask 1044360
        %376 = vst.msk [vmem:[#allocation2 + $0x38] sm:$0xf] %vm375, 0.0
        %377 = vrot.lane.b32.xlu0 %v305, 112
        %v378 = vpop.permute.xlu0 %377
        %379 = vrot.lane.b32.xlu0 %v241, 112
        %v380 = vpop.permute.xlu0 %379
        %vm381 = vcmask 916480
        %v382 = vsel %vm381, %v378, %v380
        %385 = vst [vmem:[#allocation2 + $0x30] sm:$0xf0] %v382
        %vm386 = vcmask 916484
        %387 = vst.msk [vmem:[#allocation2 + $0x38] sm:$0xf0] %vm386, %v380
        %vm388 = vcmask 1048452
        %389 = vst.msk [vmem:[#allocation2 + $0x38] sm:$0xf0] %vm388, 0.0
        %390 = vrot.lane.b32.xlu0 %v286, 111
        %v391 = vpop.permute.xlu0 %390
        %392 = vrot.lane.b32.xlu0 %v287, 111
        %v393 = vpop.permute.xlu0 %392
        %vm394 = vcmask 908288
        %v395 = vsel %vm394, %v391, %v393
        %398 = vst [vmem:[#allocation2 + $0x40] sm:$0xf] %v395
        %vm399 = vcmask 904192
        %400 = vst.msk [vmem:[#allocation2 + $0x48] sm:$0xf] %vm399, %v393
        %vm401 = vcmask 1044344
        %402 = vst.msk [vmem:[#allocation2 + $0x48] sm:$0xf] %vm401, 0.0
        %v403 = vld [vmem:[%s1] sm:$0xf]
        %v404 = vld [vmem:[#allocation2] sm:$0xff]
        %v405 = vld [vmem:[#allocation2 + $0x8] sm:$0xff]
        %v406 = vld [vmem:[#allocation2 + $0x10] sm:$0xff]
        %v407 = vld [vmem:[#allocation2 + $0x18] sm:$0xff]
        %v408 = vld [vmem:[#allocation2 + $0x20] sm:$0xff]
        %v409 = vld [vmem:[#allocation2 + $0x28] sm:$0xff]
        %v410 = vld [vmem:[#allocation2 + $0x30] sm:$0xff]
        %v411 = vld [vmem:[#allocation2 + $0x38] sm:$0xff]
        %v412 = vld [vmem:[#allocation2 + $0x40] sm:$0xf]
        %v413 = vld [vmem:[#allocation2 + $0x48] sm:$0xf]
        %v414 = vld [vmem:[%s2] sm:$0xf]
        %416 = vset.pattern.permute.xlu0 0
        %417 = vperm.xlu0 %416, %v414
        %v418 = vpop.permute.xlu0 %417
        %vm420 = vcmask 293888
        %v422 = vsel %vm420, %v403, 0
        %vm424 = vcmask 1043456
        %v426 = vsel %vm424, %v412, 0
        %v429 = vsel %vm424, %v413, 0
        %431 = vmatprep.subr.mxu0 %v405
        %432 = vmatpush1.msra.mxu0 %v404
        %433 = vmatprep.subr.mxu0 %v407
        %434 = vmatpush1.msra.mxu0 %v406
        %435 = vmatprep.subr.mxu0 %v409
        %436 = vmatpush1.msra.mxu0 %v408
        %437 = vmatprep.subr.mxu0 %v411
        %438 = vmatpush1.msra.mxu0 %v410
        %439 = vmatprep.subr.mxu0 %v429
        %440 = vmatpush1.msra.mxu0 %v426
        %441 = vmatprep.subr.mxu0 0.0
        %442 = vmatpush1.msra.mxu0 0.0
        %443 = vmatprep.subr.mxu0 0.0
        %444 = vmatpush1.msra.mxu0 0.0
        %445 = vmatprep.subr.mxu0 0.0
        %446 = vmatpush1.msra.mxu0 0.0
        %447 = vmatprep.subr.mxu0 0.0
        %448 = vmatpush1.msra.mxu0 0.0
        %449 = vmatprep.subr.mxu0 0.0
        %450 = vmatpush1.msra.mxu0 0.0
        %451 = vmatprep.subr.mxu0 0.0
        %452 = vmatpush1.msra.mxu0 0.0
        %453 = vmatprep.subr.mxu0 0.0
        %454 = vmatpush1.msra.mxu0 0.0
        %455 = vmatprep.subr.mxu0 0.0
        %456 = vmatpush1.msra.mxu0 0.0
        %457 = vmatprep.subr.mxu0 0.0
        %458 = vmatpush1.msra.mxu0 0.0
        %459 = vmatprep.subr.mxu0 0.0
        %460 = vmatpush1.msra.mxu0 0.0
        %461 = vmatprep.subr.mxu0 0.0
        %462 = vmatpush1.msra.mxu0 0.0
        %463 = vmatprep.subr.mxu0 0.0
        %464 = vmatpush1.msra.mxu0 0.0
        %465 = vmatprep.subr.mxu0 0.0
        %466 = vmatpush1.msra.mxu0 0.0
        %467 = vmatprep.subr.mxu0 0.0
        %468 = vmatpush1.msra.mxu0 0.0
        %469 = vmatprep.subr.mxu0 0.0
        %470 = vmatpush1.msra.mxu0 0.0
        %471 = vmatprep.subr.mxu0 0.0
        %472 = vmatpush1.msra.mxu0 0.0
        %473 = vmatprep.subr.mxu0 0.0
        %474 = vmatpush1.msra.mxu0 0.0
        %475 = vmatprep.subr.mxu0 0.0
        %476 = vmatpush1.msra.mxu0 0.0
        %477 = vmatprep.subr.mxu0 0.0
        %478 = vmatpush1.msra.mxu0 0.0
        %479 = vmatprep.subr.mxu0 0.0
        %480 = vmatpush1.msra.mxu0 0.0
        %481 = vmatprep.subr.mxu0 0.0
        %482 = vmatpush1.msra.mxu0 0.0
        %483 = vmatprep.subr.mxu0 0.0
        %484 = vmatpush1.msra.mxu0 0.0
        %485 = vmatprep.subr.mxu0 0.0
        %486 = vmatpush1.msra.mxu0 0.0
        %487 = vmatprep.subr.mxu0 0.0
        %488 = vmatpush1.msra.mxu0 0.0
        %489 = vmatprep.subr.mxu0 0.0
        %490 = vmatpush1.msra.mxu0 0.0
        %491 = vmatprep.subr.mxu0 0.0
        %492 = vmatpush1.msra.mxu0 0.0
        %493 = vmatprep.subr.mxu0 0.0
        %494 = vmatpush1.msra.mxu0 0.0
        %495 = vmatprep.mubr.f32.mxu0 0.0
        %496 = vmatmul.mubr.f32.gmra.mrb[0].mxu0 %v422
        %v497 = vpop.f32.mrb[0].mxu0
        %v498 = vadd.f32 %v418, %v497
        %v499 = vpop.f32.mrb[0].mxu0
        %v500 = vadd.f32 %v418, %v499
        %501 = vdwg.mxu0
        %v502 = vmax.f32 %v498, 0.0
        %v503 = vmax.f32 %v500, 0.0
        %v504 = vsel %vm275, %v502, 0.0
        %v505 = vsel %vm276, %v503, 0.0
        %v506 = vsel %vm284, %v502, 0.0
        %v507 = vsel %vm285, %v503, 0.0
        %508 = vst.msk [vmem:[#allocation2] sm:$0xf] %vm288, 0.0
        %511 = vrot.lane.b32.xlu0 %v504, 17
        %v512 = vpop.permute.xlu0 %511
        %513 = vrot.lane.b32.xlu0 %v505, 17
        %v514 = vpop.permute.xlu0 %513
        %v515 = vsel %vm296, %v512, %v514
        %518 = vst.msk [vmem:[#allocation2] sm:$0xf] %vm300, %v512
        %519 = vst [vmem:[#allocation2 + $0x8] sm:$0xf] %v515
        %520 = vst.msk [vmem:[#allocation2] sm:$0xf0] %vm303, 0.0
        %v523 = vrot.slane %v502, 4
        %v524 = vrot.slane %v503, 4
        %525 = vrot.lane.b32.xlu0 %v523, 16
        %v526 = vpop.permute.xlu0 %525
        %527 = vrot.lane.b32.xlu0 %v524, 16
        %v528 = vpop.permute.xlu0 %527
        %v529 = vsel %vm310, %v526, %v528
        %532 = vst.msk [vmem:[#allocation2] sm:$0xf0] %vm314, %v526
        %533 = vst [vmem:[#allocation2 + $0x8] sm:$0xf0] %v529
        %534 = vst.msk [vmem:[#allocation2 + $0x10] sm:$0xf] %vm317, 0.0
        %537 = vrot.lane.b32.xlu0 %v506, 15
        %v538 = vpop.permute.xlu0 %537
        %539 = vrot.lane.b32.xlu0 %v507, 15
        %v540 = vpop.permute.xlu0 %539
        %v541 = vsel %vm325, %v538, %v540
        %544 = vst.msk [vmem:[#allocation2 + $0x10] sm:$0xf] %vm329, %v538
        %545 = vst [vmem:[#allocation2 + $0x18] sm:$0xf] %v541
        %546 = vst.msk [vmem:[#allocation2 + $0x10] sm:$0xf0] %vm332, 0.0
        %v547 = vrot.slane %v504, 4
        %v548 = vrot.slane %v505, 4
        %549 = vrot.lane.b32.xlu0 %v547, 1
        %v550 = vpop.permute.xlu0 %549
        %551 = vrot.lane.b32.xlu0 %v548, 1
        %v552 = vpop.permute.xlu0 %551
        %v553 = vsel %vm340, %v550, %v552
        %556 = vst.msk [vmem:[#allocation2 + $0x10] sm:$0xf0] %vm344, %v550
        %557 = vst [vmem:[#allocation2 + $0x18] sm:$0xf0] %v553
        %558 = vst [vmem:[#allocation2 + $0x20] sm:$0xf] %v502
        %559 = vst [vmem:[#allocation2 + $0x28] sm:$0xf] %v503
        %v560 = vrot.slane %v506, 4
        %v561 = vrot.slane %v507, 4
        %562 = vrot.lane.b32.xlu0 %v560, 127
        %v563 = vpop.permute.xlu0 %562
        %564 = vrot.lane.b32.xlu0 %v561, 127
        %v565 = vpop.permute.xlu0 %564
        %v566 = vsel %vm355, %v563, %v565
        %569 = vst [vmem:[#allocation2 + $0x20] sm:$0xf0] %v566
        %570 = vst.msk [vmem:[#allocation2 + $0x28] sm:$0xf0] %vm360, %v565
        %571 = vst.msk [vmem:[#allocation2 + $0x28] sm:$0xf0] %vm362, 0.0
        %572 = vrot.lane.b32.xlu0 %v504, 113
        %v573 = vpop.permute.xlu0 %572
        %574 = vrot.lane.b32.xlu0 %v505, 113
        %v575 = vpop.permute.xlu0 %574
        %v576 = vsel %vm368, %v573, %v575
        %579 = vst [vmem:[#allocation2 + $0x30] sm:$0xf] %v576
        %580 = vst.msk [vmem:[#allocation2 + $0x38] sm:$0xf] %vm373, %v575
        %581 = vst.msk [vmem:[#allocation2 + $0x38] sm:$0xf] %vm375, 0.0
        %582 = vrot.lane.b32.xlu0 %v523, 112
        %v583 = vpop.permute.xlu0 %582
        %584 = vrot.lane.b32.xlu0 %v524, 112
        %v585 = vpop.permute.xlu0 %584
        %v586 = vsel %vm381, %v583, %v585
        %589 = vst [vmem:[#allocation2 + $0x30] sm:$0xf0] %v586
        %590 = vst.msk [vmem:[#allocation2 + $0x38] sm:$0xf0] %vm386, %v585
        %591 = vst.msk [vmem:[#allocation2 + $0x38] sm:$0xf0] %vm388, 0.0
        %592 = vrot.lane.b32.xlu0 %v506, 111
        %v593 = vpop.permute.xlu0 %592
        %594 = vrot.lane.b32.xlu0 %v507, 111
        %v595 = vpop.permute.xlu0 %594
        %v596 = vsel %vm394, %v593, %v595
        %599 = vst [vmem:[#allocation2 + $0x40] sm:$0xf] %v596
        %600 = vst.msk [vmem:[#allocation2 + $0x48] sm:$0xf] %vm399, %v595
        %601 = vst.msk [vmem:[#allocation2 + $0x48] sm:$0xf] %vm401, 0.0
        %v602 = vld [vmem:[%s3] sm:$0xf]
        %v603 = vld [vmem:[#allocation2] sm:$0xff]
        %v604 = vld [vmem:[#allocation2 + $0x8] sm:$0xff]
        %v605 = vld [vmem:[#allocation2 + $0x10] sm:$0xff]
        %v606 = vld [vmem:[#allocation2 + $0x18] sm:$0xff]
        %v607 = vld [vmem:[#allocation2 + $0x20] sm:$0xff]
        %v608 = vld [vmem:[#allocation2 + $0x28] sm:$0xff]
        %v609 = vld [vmem:[#allocation2 + $0x30] sm:$0xff]
        %v610 = vld [vmem:[#allocation2 + $0x38] sm:$0xff]
        %v611 = vld [vmem:[#allocation2 + $0x40] sm:$0xf]
        %v612 = vld [vmem:[#allocation2 + $0x48] sm:$0xf]
        %v613 = vld [vmem:[%s4] sm:$0xf]
        %615 = vset.pattern.permute.xlu0 0
        %616 = vperm.xlu0 %615, %v613
        %v617 = vpop.permute.xlu0 %616
        %v620 = vsel %vm420, %v602, 0
        %v623 = vsel %vm424, %v611, 0
        %v626 = vsel %vm424, %v612, 0
        %628 = vmatprep.subr.mxu0 %v604
        %629 = vmatpush1.msra.mxu0 %v603
        %630 = vmatprep.subr.mxu0 %v606
        %631 = vmatpush1.msra.mxu0 %v605
        %632 = vmatprep.subr.mxu0 %v608
        %633 = vmatpush1.msra.mxu0 %v607
        %634 = vmatprep.subr.mxu0 %v610
        %635 = vmatpush1.msra.mxu0 %v609
        %636 = vmatprep.subr.mxu0 %v626
        %637 = vmatpush1.msra.mxu0 %v623
        %638 = vmatprep.subr.mxu0 0.0
        %639 = vmatpush1.msra.mxu0 0.0
        %640 = vmatprep.subr.mxu0 0.0
        %641 = vmatpush1.msra.mxu0 0.0
        %642 = vmatprep.subr.mxu0 0.0
        %643 = vmatpush1.msra.mxu0 0.0
        %644 = vmatprep.subr.mxu0 0.0
        %645 = vmatpush1.msra.mxu0 0.0
        %646 = vmatprep.subr.mxu0 0.0
        %647 = vmatpush1.msra.mxu0 0.0
        %648 = vmatprep.subr.mxu0 0.0
        %649 = vmatpush1.msra.mxu0 0.0
        %650 = vmatprep.subr.mxu0 0.0
        %651 = vmatpush1.msra.mxu0 0.0
        %652 = vmatprep.subr.mxu0 0.0
        %653 = vmatpush1.msra.mxu0 0.0
        %654 = vmatprep.subr.mxu0 0.0
        %655 = vmatpush1.msra.mxu0 0.0
        %656 = vmatprep.subr.mxu0 0.0
        %657 = vmatpush1.msra.mxu0 0.0
        %658 = vmatprep.subr.mxu0 0.0
        %659 = vmatpush1.msra.mxu0 0.0
        %660 = vmatprep.subr.mxu0 0.0
        %661 = vmatpush1.msra.mxu0 0.0
        %662 = vmatprep.subr.mxu0 0.0
        %663 = vmatpush1.msra.mxu0 0.0
        %664 = vmatprep.subr.mxu0 0.0
        %665 = vmatpush1.msra.mxu0 0.0
        %666 = vmatprep.subr.mxu0 0.0
        %667 = vmatpush1.msra.mxu0 0.0
        %668 = vmatprep.subr.mxu0 0.0
        %669 = vmatpush1.msra.mxu0 0.0
        %670 = vmatprep.subr.mxu0 0.0
        %671 = vmatpush1.msra.mxu0 0.0
        %672 = vmatprep.subr.mxu0 0.0
        %673 = vmatpush1.msra.mxu0 0.0
        %674 = vmatprep.subr.mxu0 0.0
        %675 = vmatpush1.msra.mxu0 0.0
        %676 = vmatprep.subr.mxu0 0.0
        %677 = vmatpush1.msra.mxu0 0.0
        %678 = vmatprep.subr.mxu0 0.0
        %679 = vmatpush1.msra.mxu0 0.0
        %680 = vmatprep.subr.mxu0 0.0
        %681 = vmatpush1.msra.mxu0 0.0
        %682 = vmatprep.subr.mxu0 0.0
        %683 = vmatpush1.msra.mxu0 0.0
        %684 = vmatprep.subr.mxu0 0.0
        %685 = vmatpush1.msra.mxu0 0.0
        %686 = vmatprep.subr.mxu0 0.0
        %687 = vmatpush1.msra.mxu0 0.0
        %688 = vmatprep.subr.mxu0 0.0
        %689 = vmatpush1.msra.mxu0 0.0
        %690 = vmatprep.subr.mxu0 0.0
        %691 = vmatpush1.msra.mxu0 0.0
        %692 = vmatprep.mubr.f32.mxu0 0.0
        %693 = vmatmul.mubr.f32.gmra.mrb[0].mxu0 %v620
        %v694 = vpop.f32.mrb[0].mxu0
        %v695 = vadd.f32 %v617, %v694
        %v696 = vpop.f32.mrb[0].mxu0
        %v697 = vadd.f32 %v617, %v696
        %698 = vdwg.mxu0
        %v699 = vmax.f32 %v695, 0.0
        %v700 = vmax.f32 %v697, 0.0
        %v701 = vadd.f32 %v699, %v241
        %v702 = vadd.f32 %v700, %v278
        %v705 = vcombine.low %v701, %v702
        %707 = vst [vmem:[%s240] sm:$0xff] %v705
        %s708 = sand.u32 %s140, 1
        %s709 = scalar_lea.sflag [#allocation5], %s708
        %s710 = sand.u32 %s140, 1
        %s711 = smul.addr %s710, 8
        %s712 = scalar_lea.vmem [#allocation6], %s711
        // Predicated region
        $region45: #{tpu_custom_call.1} parent=39 // pred_check
          %p713 = pneg %p150
        $region46: #{tpu_custom_call.1} parent=39 // pred_check_branch
          %715 = sbr.rel (%p713) target = $region48
        $region47: #{tpu_custom_call.1} parent=39 // pred_region
          %s717 = ssub.s32 128, 128
          %718 = vsyncadd %s709, %s717
          %s719 = smul.addr %s22, 2
          %s720 = smul.addr %s719, 64
          %s721 = scalar_lea.hbm %s5, %s720
          %s723 = sshll.u32 %s712, 4
          %s724 = int_to_ptr.vmem [resolvable:$true] %s723
          %726 = dma.vmem_to_hbm [thread:$0]  %s724, 128, %s721, %s709
        $region48: #{tpu_custom_call.1} parent=39 // pred_fallthru
          _
      $region40: #{tpu_custom_call.1} parent=5 // pred_fallthru
        _
      %p727 = scmp.le.s32.totalorder 2, %s17
      // Predicated region
      $region49: #{tpu_custom_call.1} parent=5 // pred_check
        %p728 = pneg %p727
      $region50: #{tpu_custom_call.1} parent=5 // pred_check_branch
        %730 = sbr.rel (%p728) target = $region52
      $region51: #{tpu_custom_call.1} parent=5 // pred_region
        %s731 = ssub.s32 %s17, 2
        // Predicated region
        $region53: #{tpu_custom_call.1} parent=51 // pred_check
          %p732 = pneg %p156
        $region54: #{tpu_custom_call.1} parent=51 // pred_check_branch
          %734 = sbr.rel (%p732) target = $region56
        $region55: #{tpu_custom_call.1} parent=51 // pred_region
          %s735 = sand.u32 %s141, 1
          %s736 = scalar_lea.sflag [#allocation5], %s735
          %s737 = sand.u32 %s141, 1
          %s738 = smul.addr %s737, 8
          %s739 = scalar_lea.vmem [#allocation6], %s738
          %740 = dma.done %s736, 128
        $region56: #{tpu_custom_call.1} parent=51 // pred_fallthru
          _
      $region52: #{tpu_custom_call.1} parent=5 // pred_fallthru
        _
    $region6: #{tpu_custom_call.1} parent=1 // loop_footer
      %s21 = sadd.s32 1, %s17
    $region7: #{tpu_custom_call.1} parent=1 // loop_footer_branch
      %16 = sbr.rel target = $region3
    $region8: #{tpu_custom_call.1} parent=1 // loop_exit
      _
    %741 = vsyncpa [#allocation4], 1
    %s742 = scalar_lea.sflag [#allocation4], 1
    %743 = vsyncpa %s742, 1
    %744 = vsyncpa [#allocation5], 1
    %s745 = scalar_lea.sflag [#allocation5], 1
    %746 = vsyncpa %s745, 1

</llo_original>
